<compile_context>
chip_gen: v5e
topology: v5e:2x2
jax: 0.10.0
libtpu: 0.0.40
codegen_flags: <defaults>
</compile_context>

<pallas_src>
import jax
import jax.numpy as jnp
from jax.experimental import pallas as pl
from jax.experimental.pallas import tpu as pltpu

IN_F = 375
HID_F = 25
OUT_F = 15


def _fused_kernel(x_ref, w_ref, b_ref, o_ref):
    # One MXU matmul per batch tile, f32 accumulation, f32 bias add on the VPU,
    # narrow (tb, 15) store.  The activation cast (if any) happens here in
    # VMEM -- no extra HBM round-trip in the wrapper.
    x = x_ref[...]
    w = w_ref[...]
    if x.dtype != w.dtype:
        x = x.astype(w.dtype)
    acc = jnp.dot(x, w, preferred_element_type=jnp.float32)
    o_ref[...] = (acc + b_ref[...]).astype(o_ref.dtype)


def fuse_params(w1, b1, w2, b2, compute_dtype=jnp.bfloat16):
    """Fold the two linear layers into one.  Call ONCE at parameter-load time.

    w1: (375, 25), b1: (25,), w2: (25, 15), b2: (15,)  (weights stored as
    (in_features, out_features), i.e. transposed vs. torch's layout).
    Returns (w_eff, b_eff): (375, 15) in `compute_dtype`, (1, 15) f32.
    """
    w_eff = jnp.dot(w1.astype(jnp.float32), w2.astype(jnp.float32))
    b_eff = jnp.dot(b1.astype(jnp.float32), w2.astype(jnp.float32)) + b2.astype(jnp.float32)
    return w_eff.astype(compute_dtype), b_eff.reshape(1, OUT_F)


def linear_projection_dbp(feature, w_eff, b_eff, *, tb=4096):
    """Forward pass of Linear_Projection_DBP on pre-fused parameters.

    feature: (B, 375) float array.
    w_eff:   (375, 15) fused weight (bf16 or f32); b_eff: (1, 15) f32.
    tb:      batch tile (rounded down to a multiple of 8).
    """
    B = feature.shape[0]
    out_dtype = feature.dtype

    # Small-batch fallback: a single-step grid gains nothing from a Pallas
    # launch (and would leave one v7x TensorCore idle) -- plain XLA wins.
    if B <= tb:
        acc = jnp.dot(feature.astype(w_eff.dtype), w_eff,
                      preferred_element_type=jnp.float32)
        return (acc + b_eff).astype(out_dtype)

    tb = max(8, (tb // 8) * 8)
    grid = (pl.cdiv(B, tb),)  # B > tb here => >= 2 parallel steps (v7x megacore).

    cost = pl.CostEstimate(
        flops=2 * B * IN_F * OUT_F,
        transcendentals=0,
        bytes_accessed=(B * IN_F * feature.dtype.itemsize
                        + B * OUT_F * jnp.dtype(out_dtype).itemsize
                        + w_eff.size * w_eff.dtype.itemsize
                        + b_eff.size * 4),
    )

    return pl.pallas_call(
        _fused_kernel,
        out_shape=jax.ShapeDtypeStruct((B, OUT_F), out_dtype),
        grid=grid,
        in_specs=[
            pl.BlockSpec((tb, IN_F), lambda i: (i, 0)),      # batch tile, pipelined
            pl.BlockSpec((IN_F, OUT_F), lambda i: (0, 0)),   # fused weight, resident
            pl.BlockSpec((1, OUT_F), lambda i: (0, 0)),      # fused bias, resident
        ],
        out_specs=pl.BlockSpec((tb, OUT_F), lambda i: (i, 0)),
        compiler_params=pltpu.CompilerParams(
            dimension_semantics=("parallel",),
            # Double-buffered f32 (tb, 375) input + (tb, 15) output fit well
            # under this even at tb=8192; safe on v5e/v6e/v7x.
            vmem_limit_bytes=32 * 1024 * 1024,
        ),
        cost_estimate=cost,
    )(feature, w_eff, b_eff)


def init_params(key):
    """Deterministic init mirroring nn.Linear defaults (U[-1/sqrt(fan_in), +1/sqrt(fan_in)]).
    Weights returned pre-transposed to (in, out)."""
    k1, k2, k3, k4 = jax.random.split(key, 4)
    bound1 = 1.0 / jnp.sqrt(jnp.float32(IN_F))
    bound2 = 1.0 / jnp.sqrt(jnp.float32(HID_F))
    w1 = jax.random.uniform(k1, (IN_F, HID_F), jnp.float32, -bound1, bound1)
    b1 = jax.random.uniform(k2, (HID_F,), jnp.float32, -bound1, bound1)
    w2 = jax.random.uniform(k3, (HID_F, OUT_F), jnp.float32, -bound2, bound2)
    b2 = jax.random.uniform(k4, (OUT_F,), jnp.float32, -bound2, bound2)
    return w1, b1, w2, b2


if __name__ == "__main__":
    key = jax.random.PRNGKey(0)
    kx, kp = jax.random.split(key)
    w1, b1, w2, b2 = init_params(kp)

    # Reference = the original two-step module, f32.
    B = 20
    feature = jax.random.normal(kx, (B, IN_F), jnp.float32)
    ref = (feature @ w1 + b1) @ w2 + b2

    # Pallas path, f32 compute: B=20 with tb=8 -> 3-step parallel grid with a
    # partial trailing block (exercises cdiv tiling; no wrapper pad/slice).
    w_f32, b_eff = fuse_params(w1, b1, w2, b2, compute_dtype=jnp.float32)
    out_f32 = jax.block_until_ready(
        linear_projection_dbp(feature, w_f32, b_eff, tb=8))
    assert out_f32.shape == (B, OUT_F), out_f32.shape
    assert jnp.allclose(out_f32, ref, atol=1e-4, rtol=1e-4), \
        float(jnp.max(jnp.abs(out_f32 - ref)))

    # Pallas path, default bf16 compute (cast happens inside the kernel).
    w_bf16, b_eff = fuse_params(w1, b1, w2, b2)  # bf16 fused weight
    out_bf16 = jax.block_until_ready(
        linear_projection_dbp(feature, w_bf16, b_eff, tb=8))
    assert out_bf16.shape == (B, OUT_F), out_bf16.shape
    assert jnp.allclose(out_bf16, ref, atol=2e-2, rtol=2e-2), \
        float(jnp.max(jnp.abs(out_bf16 - ref)))

    # Small-batch fallback path (single grid step -> plain XLA).
    out_small = jax.block_until_ready(
        linear_projection_dbp(feature[:4], w_bf16, b_eff))
    assert out_small.shape == (4, OUT_F), out_small.shape
    assert jnp.allclose(out_small, ref[:4], atol=2e-2, rtol=2e-2), \
        float(jnp.max(jnp.abs(out_small - ref[:4])))

    print("KERNEL_OK")
</pallas_src>

<mosaic_0001>
module attributes {stable_mosaic.version = 11 : i64} {
  func.func @_fused_kernel(%arg0: i32, %arg1: memref<8x375xf32, #tpu.memory_space<vmem>>, %arg2: memref<375x15xf32, #tpu.memory_space<vmem>>, %arg3: memref<1x15xf32, #tpu.memory_space<vmem>>, %arg4: memref<8x15xf32, #tpu.memory_space<vmem>>) attributes {dimension_semantics = [#tpu.dimension_semantics<parallel>], iteration_bounds = array<i64: 3>, scalar_prefetch = 0 : i64, scratch_operands = 0 : i64, tpu.core_type = #tpu.core_type<tc>, window_params = [{transform_indices = @transform_0, window_bounds = array<i64: 8, 375>}, {pipeline_mode = #tpu.pipeline_mode<synchronous>, transform_indices = @transform_1, window_bounds = array<i64: 375, 15>}, {pipeline_mode = #tpu.pipeline_mode<synchronous>, transform_indices = @transform_2, window_bounds = array<i64: 1, 15>}, {transform_indices = @transform_3, window_bounds = array<i64: 8, 15>}]} {
    %c0 = arith.constant 0 : index
    %c0_0 = arith.constant 0 : index
    %0 = vector.load %arg1[%c0, %c0_0] : memref<8x375xf32, #tpu.memory_space<vmem>>, vector<8x375xf32>
    %c0_1 = arith.constant 0 : index
    %c0_2 = arith.constant 0 : index
    %1 = vector.load %arg2[%c0_1, %c0_2] : memref<375x15xf32, #tpu.memory_space<vmem>>, vector<375x15xf32>
    %cst = arith.constant dense<0.000000e+00> : vector<8x15xf32>
    %2 = tpu.matmul %0, %1, %cst {dimension_numbers = #tpu.dot_dimension_numbers<[1], [0], [0], [1], [0, 0, 1, 1], [], []>} : vector<8x375xf32>, vector<375x15xf32>, vector<8x15xf32> -> vector<8x15xf32>
    %c0_3 = arith.constant 0 : index
    %c0_4 = arith.constant 0 : index
    %3 = vector.load %arg3[%c0_3, %c0_4] : memref<1x15xf32, #tpu.memory_space<vmem>>, vector<1x15xf32>
    %4 = vector.broadcast %3 : vector<1x15xf32> to vector<8x15xf32>
    %5 = arith.addf %2, %4 : vector<8x15xf32>
    %c0_5 = arith.constant 0 : index
    %c0_6 = arith.constant 0 : index
    %6 = vector.load %arg4[%c0_5, %c0_6] : memref<8x15xf32, #tpu.memory_space<vmem>>, vector<8x15xf32>
    tpu.vector_store %arg4[%c0_5, %c0_6], %5 {strides = array<i32>} : memref<8x15xf32, #tpu.memory_space<vmem>>, vector<8x15xf32>,
    return
  }
  func.func @transform_0(%arg0: i32) -> (i32, i32) {
    %c0_i32 = arith.constant 0 : i32
    %c0_i32_0 = arith.constant 0 : i32
    return %arg0, %c0_i32 : i32, i32
  }
  func.func @transform_1(%arg0: i32) -> (i32, i32) {
    %c0_i32 = arith.constant 0 : i32
    %c0_i32_0 = arith.constant 0 : i32
    %c0_i32_1 = arith.constant 0 : i32
    return %c0_i32, %c0_i32_0 : i32, i32
  }
  func.func @transform_2(%arg0: i32) -> (i32, i32) {
    %c0_i32 = arith.constant 0 : i32
    %c0_i32_0 = arith.constant 0 : i32
    %c0_i32_1 = arith.constant 0 : i32
    return %c0_i32, %c0_i32_0 : i32, i32
  }
  func.func @transform_3(%arg0: i32) -> (i32, i32) {
    %c0_i32 = arith.constant 0 : i32
    %c0_i32_0 = arith.constant 0 : i32
    return %arg0, %c0_i32 : i32, i32
  }
}

</mosaic_0001>

<llo_original>
// kernel: tpu_custom_call.1
$region0: #{tpu_custom_call.1}
  #allocation0 [shape = 'u32[]', space=smem, size = 0x4, offset = 0x4, fixed_abs, tag = 'smem constant byte address 0x4 - core index']
  #allocation1 [shape = 'u32[72,128]{1,0:T(1,128)}', space=vmem, size = 0x9000, scoped, tag = 'internal scratch']
  %s0 = inlined_call_operand.vmem [shape: f32[20,375], index: 0, kind: input, shape index: {}]
  %s1 = inlined_call_operand.vmem [shape: f32[375,15], index: 1, kind: input, shape index: {}]
  %s2 = inlined_call_operand.vmem [shape: f32[1,15], index: 2, kind: input, shape index: {}]
  %s3 = inlined_call_operand.vmem [shape: f32[20,15], index: 3, kind: output, shape index: {}]
  %s4 = sld [smem:[#allocation0]]
  $region45: #{tpu_custom_call.1} parent=0
    _
  %s6 = ssub.s32 1, %s4
  %s7 = scalar_select 0, %s6, %s4
  loop: start=0, step=1, limit=5
  $region2: #{tpu_custom_call.1} parent=0 // loop_pre_header
    _
  $region3: #{tpu_custom_call.1} parent=0 // loop_header
    %s9 = sphi 0, %s13
    %p10 = scmp.ge.s32.totalorder %s9, 5
    %s19 = sphi 0, %s21
    %s22 = sphi 0, %s19
    %s23 = sphi 0, %s22
    %s39 = sphi 0, %s23
    %s43 = sphi 0, %s43
    %s45 = sphi 0, %s43
    %s46 = sphi 0, %s45
    %s60 = sphi 0, %s46
    %s64 = sphi 0, %s64
    %s66 = sphi 0, %s64
    %s67 = sphi 0, %s66
    %s81 = sphi 0, %s67
    %s87 = sphi 0, %s89
    %s90 = sphi 0, %s87
    %s91 = sphi 0, %s90
    %s107 = sphi 0, %s91
  $region4: #{tpu_custom_call.1} parent=0 // loop_header_branch
    %12 = sbr.rel (%p10) target = $region8
  $region5: #{tpu_custom_call.1} parent=0 // loop_body
    %s14 = ssub.s32 %s9, 1
    %s15 = ssub.s32 %s9, 2
    %s16 = sadd.s32 %s9, 1
    %s17 = ssub.s32 %s9, %s16
    %p18 = scmp.eq.s32.totalorder %s17, 0
    %s20 = sadd.s32 %s19, 1
    %s21 = scalar_select %p18, %s19, %s20
    %p24 = pneg %p18
    %p25 = scmp.eq.s32.totalorder %s9, 2
    %p26 = por %p24, %p25
    %p27 = scmp.ne.s32.totalorder %s19, %s22
    %p28 = scmp.eq.s32.totalorder %s9, 0
    %p29 = por %p27, %p28
    %p30 = scmp.ne.s32.totalorder %s19, %s22
    %p31 = scmp.eq.s32.totalorder %s14, 2
    %p32 = por %p30, %p31
    %p33 = scmp.ne.s32.totalorder %s22, %s23
    %p34 = scmp.eq.s32.totalorder %s14, 0
    %p35 = por %p33, %p34
    %p36 = scmp.ne.s32.totalorder %s22, %s23
    %p37 = scmp.eq.s32.totalorder %s15, 2
    %p38 = por %p36, %p37
    %p40 = scmp.ne.s32.totalorder %s23, %s39
    %p41 = scmp.eq.s32.totalorder %s15, 0
    %p42 = por %p40, %p41
    %s44 = sadd.s32 %s43, 1
    %p47 = scmp.eq.s32.totalorder %s9, 2
    %p48 = scmp.ne.s32.totalorder %s43, %s45
    %p49 = scmp.eq.s32.totalorder %s9, 0
    %p50 = por %p48, %p49
    %p51 = scmp.ne.s32.totalorder %s43, %s45
    %p52 = scmp.eq.s32.totalorder %s14, 2
    %p53 = por %p51, %p52
    %p54 = scmp.ne.s32.totalorder %s45, %s46
    %p55 = scmp.eq.s32.totalorder %s14, 0
    %p56 = por %p54, %p55
    %p57 = scmp.ne.s32.totalorder %s45, %s46
    %p58 = scmp.eq.s32.totalorder %s15, 2
    %p59 = por %p57, %p58
    %p61 = scmp.ne.s32.totalorder %s46, %s60
    %p62 = scmp.eq.s32.totalorder %s15, 0
    %p63 = por %p61, %p62
    %s65 = sadd.s32 %s64, 1
    %p68 = scmp.eq.s32.totalorder %s9, 2
    %p69 = scmp.ne.s32.totalorder %s64, %s66
    %p70 = scmp.eq.s32.totalorder %s9, 0
    %p71 = por %p69, %p70
    %p72 = scmp.ne.s32.totalorder %s64, %s66
    %p73 = scmp.eq.s32.totalorder %s14, 2
    %p74 = por %p72, %p73
    %p75 = scmp.ne.s32.totalorder %s66, %s67
    %p76 = scmp.eq.s32.totalorder %s14, 0
    %p77 = por %p75, %p76
    %p78 = scmp.ne.s32.totalorder %s66, %s67
    %p79 = scmp.eq.s32.totalorder %s15, 2
    %p80 = por %p78, %p79
    %p82 = scmp.ne.s32.totalorder %s67, %s81
    %p83 = scmp.eq.s32.totalorder %s15, 0
    %p84 = por %p82, %p83
    %s85 = ssub.s32 %s9, %s16
    %p86 = scmp.eq.s32.totalorder %s85, 0
    %s88 = sadd.s32 %s87, 1
    %s89 = scalar_select %p86, %s87, %s88
    %p92 = pneg %p86
    %p93 = scmp.eq.s32.totalorder %s9, 2
    %p94 = por %p92, %p93
    %p95 = scmp.ne.s32.totalorder %s87, %s90
    %p96 = scmp.eq.s32.totalorder %s9, 0
    %p97 = por %p95, %p96
    %p98 = scmp.ne.s32.totalorder %s87, %s90
    %p99 = scmp.eq.s32.totalorder %s14, 2
    %p100 = por %p98, %p99
    %p101 = scmp.ne.s32.totalorder %s90, %s91
    %p102 = scmp.eq.s32.totalorder %s14, 0
    %p103 = por %p101, %p102
    %p104 = scmp.ne.s32.totalorder %s90, %s91
    %p105 = scmp.eq.s32.totalorder %s15, 2
    %p106 = por %p104, %p105
    %p108 = scmp.ne.s32.totalorder %s91, %s107
    %p109 = scmp.eq.s32.totalorder %s15, 0
    %p110 = por %p108, %p109
    %p111 = scmp.le.s32.totalorder 1, %s9
    %p112 = scmp.lt.s32.totalorder %s9, 4
    %p113 = pnand %p111, %p112
    %p114 = pneg %p113
    // Predicated region
    $region9: #{tpu_custom_call.1} parent=5 // pred_check
      _
    $region10: #{tpu_custom_call.1} parent=5 // pred_check_branch
      %116 = sbr.rel (%p113) target = $region12
    $region11: #{tpu_custom_call.1} parent=5 // pred_region
      %s117 = ssub.s32 %s9, 1
      // Predicated region
      $region13: #{tpu_custom_call.1} parent=11 // pred_check
        %p118 = pneg %p56
      $region14: #{tpu_custom_call.1} parent=11 // pred_check_branch
        %120 = sbr.rel (%p118) target = $region16
      $region15: #{tpu_custom_call.1} parent=11 // pred_region
        _
      $region16: #{tpu_custom_call.1} parent=11 // pred_fallthru
        _
      // Predicated region
      $region17: #{tpu_custom_call.1} parent=11 // pred_check
        %p121 = pneg %p77
      $region18: #{tpu_custom_call.1} parent=11 // pred_check_branch
        %123 = sbr.rel (%p121) target = $region20
      $region19: #{tpu_custom_call.1} parent=11 // pred_region
        _
      $region20: #{tpu_custom_call.1} parent=11 // pred_fallthru
        _
    $region12: #{tpu_custom_call.1} parent=5 // pred_fallthru
      _
    %p124 = scmp.lt.s32.totalorder %s9, 3
    // Predicated region
    $region21: #{tpu_custom_call.1} parent=5 // pred_check
      %p125 = pneg %p124
    $region22: #{tpu_custom_call.1} parent=5 // pred_check_branch
      %127 = sbr.rel (%p125) target = $region24
    $region23: #{tpu_custom_call.1} parent=5 // pred_region
      // Predicated region
      $region25: #{tpu_custom_call.1} parent=23 // pred_check
        %p128 = pneg %p29
      $region26: #{tpu_custom_call.1} parent=23 // pred_check_branch
        %130 = sbr.rel (%p128) target = $region28
      $region27: #{tpu_custom_call.1} parent=23 // pred_region
        %p131 = scmp.lt.s32.totalorder %s9, 2
        %s132 = scalar_select %p131, %s9, 2
        %s133 = smul.addr %s132, 3
        %s134 = smul.addr %s133, 8
        %s135 = scalar_lea.vmem %s0, %s134
      $region28: #{tpu_custom_call.1} parent=23 // pred_fallthru
        _
    $region24: #{tpu_custom_call.1} parent=5 // pred_fallthru
      _
    %p136 = scmp.le.s32.totalorder 1, %s9
    %p137 = scmp.lt.s32.totalorder %s9, 4
    %p138 = pnand %p136, %p137
    %p139 = pneg %p138
    // Predicated region
    $region29: #{tpu_custom_call.1} parent=5 // pred_check
      _
    $region30: #{tpu_custom_call.1} parent=5 // pred_check_branch
      %141 = sbr.rel (%p138) target = $region32
    $region31: #{tpu_custom_call.1} parent=5 // pred_region
      %s142 = ssub.s32 %s9, 1
      %p143 = scmp.lt.s32.totalorder %s14, 2
      %s144 = scalar_select %p143, %s14, 2
      %s145 = smul.addr %s144, 3
      %s146 = smul.addr %s145, 8
      %s147 = scalar_lea.vmem %s0, %s146
      %p148 = pneg %p35
      %p149 = pneg %p32
      %p150 = pneg %p56
      %p151 = pneg %p53
      %p152 = pneg %p77
      %p153 = pneg %p74
      %p154 = pneg %p103
      %p155 = pneg %p100
      %p156 = scmp.lt.s32.totalorder %s14, 2
      %s157 = scalar_select %p156, %s14, 2
      %s158 = smul.addr %s157, 8
      %s159 = scalar_lea.vmem %s3, %s158
      %p160 = scmp.lt.s32.totalorder %s14, 2
      %s161 = scalar_select %p160, %s14, 2
      %s162 = smul.addr %s161, 3
      %s163 = smul.addr %s162, 8
      %s164 = scalar_lea.vmem %s0, %s163
      %p165 = scmp.lt.s32.totalorder %s14, 2
      %s166 = scalar_select %p165, %s14, 2
      %s167 = smul.addr %s166, 8
      %s168 = scalar_lea.vmem %s3, %s167
      %v169 = vld [vmem:[%s164] sm:$0xff]
      %v170 = vld [vmem:[%s164 + $0x8] sm:$0xff]
      %v171 = vld [vmem:[%s164 + $0x10] sm:$0xff]
      %v172 = vld [vmem:[%s1] sm:$0xff]
      %v173 = vld [vmem:[%s1 + $0x8] sm:$0xff]
      %v174 = vld [vmem:[%s1 + $0x10] sm:$0xff]
      %v175 = vld [vmem:[%s1 + $0x18] sm:$0xff]
      %v176 = vld [vmem:[%s1 + $0x20] sm:$0xff]
      %v177 = vld [vmem:[%s1 + $0x28] sm:$0xff]
      %v178 = vld [vmem:[%s1 + $0x30] sm:$0xff]
      %v179 = vld [vmem:[%s1 + $0x38] sm:$0xff]
      %v180 = vld [vmem:[%s1 + $0x40] sm:$0xff]
      %v181 = vld [vmem:[%s1 + $0x48] sm:$0xff]
      %v182 = vld [vmem:[%s1 + $0x50] sm:$0xff]
      %v183 = vld [vmem:[%s1 + $0x58] sm:$0xff]
      %v184 = vld [vmem:[%s1 + $0x60] sm:$0xff]
      %v185 = vld [vmem:[%s1 + $0x68] sm:$0xff]
      %v186 = vld [vmem:[%s1 + $0x70] sm:$0xff]
      %v187 = vld [vmem:[%s1 + $0x78] sm:$0xff]
      %v188 = vld [vmem:[%s1 + $0x80] sm:$0xff]
      %v189 = vld [vmem:[%s1 + $0x88] sm:$0xff]
      %v190 = vld [vmem:[%s1 + $0x90] sm:$0xff]
      %v191 = vld [vmem:[%s1 + $0x98] sm:$0xff]
      %v192 = vld [vmem:[%s1 + $0xa0] sm:$0xff]
      %v193 = vld [vmem:[%s1 + $0xa8] sm:$0xff]
      %v194 = vld [vmem:[%s1 + $0xb0] sm:$0xff]
      %v195 = vld [vmem:[%s1 + $0xb8] sm:$0xff]
      %v196 = vld [vmem:[%s1 + $0xc0] sm:$0xff]
      %v197 = vld [vmem:[%s1 + $0xc8] sm:$0xff]
      %v198 = vld [vmem:[%s1 + $0xd0] sm:$0xff]
      %v199 = vld [vmem:[%s1 + $0xd8] sm:$0xff]
      %v200 = vld [vmem:[%s1 + $0xe0] sm:$0xff]
      %v201 = vld [vmem:[%s1 + $0xe8] sm:$0xff]
      %v202 = vld [vmem:[%s1 + $0xf0] sm:$0xff]
      %v203 = vld [vmem:[%s1 + $0xf8] sm:$0xff]
      %v204 = vld [vmem:[%s1 + $0x100] sm:$0xff]
      %v205 = vld [vmem:[%s1 + $0x108] sm:$0xff]
      %v206 = vld [vmem:[%s1 + $0x110] sm:$0xff]
      %v207 = vld [vmem:[%s1 + $0x118] sm:$0xff]
      %v208 = vld [vmem:[%s1 + $0x120] sm:$0xff]
      %v209 = vld [vmem:[%s1 + $0x128] sm:$0xff]
      %v210 = vld [vmem:[%s1 + $0x130] sm:$0xff]
      %v211 = vld [vmem:[%s1 + $0x138] sm:$0xff]
      %v212 = vld [vmem:[%s1 + $0x140] sm:$0xff]
      %v213 = vld [vmem:[%s1 + $0x148] sm:$0xff]
      %v214 = vld [vmem:[%s1 + $0x150] sm:$0xff]
      %v215 = vld [vmem:[%s1 + $0x158] sm:$0xff]
      %v216 = vld [vmem:[%s1 + $0x160] sm:$0xff]
      %v217 = vld [vmem:[%s1 + $0x168] sm:$0xff]
      %v218 = vld [vmem:[%s1 + $0x170] sm:$0x7f]
      %v219 = vld [vmem:[%s2] sm:$0x1]
      %v221 = vperm.slane %v219, 0
      %vm223 = vcmask 973824
      %v225 = vsel %vm223, %v171, 0
      %vm227 = vcmask 1046528
      %v229 = vsel %vm227, %v218, 0
      %231 = vmatpush.msra.mxu0 %v187
      %232 = vmatpush.msra.mxu0 %v186
      %233 = vmatpush.msra.mxu0 %v185
      %234 = vmatpush.msra.mxu0 %v184
      %235 = vmatpush.msra.mxu0 %v183
      %236 = vmatpush.msra.mxu0 %v182
      %237 = vmatpush.msra.mxu0 %v181
      %238 = vmatpush.msra.mxu0 %v180
      %239 = vmatpush.msra.mxu0 %v179
      %240 = vmatpush.msra.mxu0 %v178
      %241 = vmatpush.msra.mxu0 %v177
      %242 = vmatpush.msra.mxu0 %v176
      %243 = vmatpush.msra.mxu0 %v175
      %244 = vmatpush.msra.mxu0 %v174
      %245 = vmatpush.msra.mxu0 %v173
      %246 = vmatpush.msra.mxu0 %v172
      %247 = vmatmul.f32.gmra.mxu0 %v169
      %v248 = vpop.f32.mrf.mxu0
      %v249 = vadd.f32 %v221, %v248
      %250 = vdwg.mxu0
      %251 = vmatpush.msra.mxu0 %v203
      %252 = vmatpush.msra.mxu0 %v202
      %253 = vmatpush.msra.mxu0 %v201
      %254 = vmatpush.msra.mxu0 %v200
      %255 = vmatpush.msra.mxu0 %v199
      %256 = vmatpush.msra.mxu0 %v198
      %257 = vmatpush.msra.mxu0 %v197
      %258 = vmatpush.msra.mxu0 %v196
      %259 = vmatpush.msra.mxu0 %v195
      %260 = vmatpush.msra.mxu0 %v194
      %261 = vmatpush.msra.mxu0 %v193
      %262 = vmatpush.msra.mxu0 %v192
      %263 = vmatpush.msra.mxu0 %v191
      %264 = vmatpush.msra.mxu0 %v190
      %265 = vmatpush.msra.mxu0 %v189
      %266 = vmatpush.msra.mxu0 %v188
      %267 = vmatmul.f32.gmra.mxu0 %v170
      %v268 = vpop.f32.mrf.mxu0
      %v269 = vadd.f32 %v249, %v268
      %270 = vdwg.mxu0
      %271 = vmatpush.msra.mxu0 0.0
      %272 = vmatpush.msra.mxu0 %v229
      %273 = vmatpush.msra.mxu0 %v217
      %274 = vmatpush.msra.mxu0 %v216
      %275 = vmatpush.msra.mxu0 %v215
      %276 = vmatpush.msra.mxu0 %v214
      %277 = vmatpush.msra.mxu0 %v213
      %278 = vmatpush.msra.mxu0 %v212
      %279 = vmatpush.msra.mxu0 %v211
      %280 = vmatpush.msra.mxu0 %v210
      %281 = vmatpush.msra.mxu0 %v209
      %282 = vmatpush.msra.mxu0 %v208
      %283 = vmatpush.msra.mxu0 %v207
      %284 = vmatpush.msra.mxu0 %v206
      %285 = vmatpush.msra.mxu0 %v205
      %286 = vmatpush.msra.mxu0 %v204
      %287 = vmatmul.f32.gmra.mxu0 %v225
      %v288 = vpop.f32.mrf.mxu0
      %v289 = vadd.f32 %v269, %v288
      %290 = vdwg.mxu0
      %vm291 = vcmask 121856
      %292 = vst.msk [vmem:[%s168] sm:$0xff] %vm291, %v289
      %p293 = scmp.lt.s32.totalorder %s14, 2
      %s294 = scalar_select %p293, %s14, 2
      %s295 = smul.addr %s294, 8
      %s296 = scalar_lea.vmem %s3, %s295
      // Predicated region
      $region33: #{tpu_custom_call.1} parent=31 // pred_check
        %p297 = pneg %p100
      $region34: #{tpu_custom_call.1} parent=31 // pred_check_branch
        %299 = sbr.rel (%p297) target = $region36
      $region35: #{tpu_custom_call.1} parent=31 // pred_region
        _
      $region36: #{tpu_custom_call.1} parent=31 // pred_fallthru
        _
    $region32: #{tpu_custom_call.1} parent=5 // pred_fallthru
      _
    %p300 = scmp.le.s32.totalorder 2, %s9
    // Predicated region
    $region37: #{tpu_custom_call.1} parent=5 // pred_check
      %p301 = pneg %p300
    $region38: #{tpu_custom_call.1} parent=5 // pred_check_branch
      %303 = sbr.rel (%p301) target = $region40
    $region39: #{tpu_custom_call.1} parent=5 // pred_region
      %s304 = ssub.s32 %s9, 2
      // Predicated region
      $region41: #{tpu_custom_call.1} parent=39 // pred_check
        %p305 = pneg %p106
      $region42: #{tpu_custom_call.1} parent=39 // pred_check_branch
        %307 = sbr.rel (%p305) target = $region44
      $region43: #{tpu_custom_call.1} parent=39 // pred_region
        %p308 = scmp.lt.s32.totalorder %s15, 2
        %s309 = scalar_select %p308, %s15, 2
        %s310 = smul.addr %s309, 8
        %s311 = scalar_lea.vmem %s3, %s310
      $region44: #{tpu_custom_call.1} parent=39 // pred_fallthru
        _
    $region40: #{tpu_custom_call.1} parent=5 // pred_fallthru
      _
  $region6: #{tpu_custom_call.1} parent=0 // loop_footer
    %s13 = sadd.s32 1, %s9
  $region7: #{tpu_custom_call.1} parent=0 // loop_footer_branch
    %8 = sbr.rel target = $region3
  $region8: #{tpu_custom_call.1} parent=0 // loop_exit
    _

</llo_original>
